<compile_context>
chip_gen: v5e
topology: v5e:2x2
jax: 0.10.0
libtpu: 0.0.40
codegen_flags: <defaults>
</compile_context>

<pallas_src>
import functools

import jax
import jax.numpy as jnp
from jax.experimental import pallas as pl
from jax.experimental.pallas import tpu as pltpu


_LANE = 128
_SUBLANE = 8
_TARGET_BLOCK_BYTES = 1 << 20  # ~1 MiB per tensor block -> ~8 MiB double-buffered


def _scaler_kernel_ft(exp_ref, est_ref, clean_ref, est_out_ref, clean_out_ref,
                      *, mag_bins, theta, eps):
    """Native layout: blocks (1, 2F, Tt); frequency on sublanes, time on lanes."""
    expo = exp_ref[0]                               # (F, 1) broadcasts over T lanes

    def _one(x_ref, o_ref):
        x = x_ref[0].astype(jnp.float32)            # (2F, Tt)
        real = x[:mag_bins, :]
        imag = x[mag_bins:, :]
        power = real * real + imag * imag
        # (power + eps) ** expo with per-frequency exponent; eps > 0 keeps log finite.
        scales = jnp.exp(expo * jnp.log(power + eps))
        scales = jnp.clip(scales, theta, 1.0)
        o_ref[0, :mag_bins, :] = scales             # "double_size": same block twice
        o_ref[0, mag_bins:, :] = scales

    _one(est_ref, est_out_ref)
    _one(clean_ref, clean_out_ref)


def _scaler_kernel_tf(exp_ref, est_ref, clean_ref, est_out_ref, clean_out_ref,
                      *, mag_bins, theta, eps):
    """Transposed layout: blocks (1, Tt, 2F); time on sublanes, frequency on lanes."""
    expo = exp_ref[0]                               # (1, F) broadcasts over T sublanes

    def _one(x_ref, o_ref):
        x = x_ref[0].astype(jnp.float32)            # (Tt, 2F)
        real = x[:, :mag_bins]
        imag = x[:, mag_bins:]
        power = real * real + imag * imag
        scales = jnp.exp(expo * jnp.log(power + eps))
        scales = jnp.clip(scales, theta, 1.0)
        o_ref[0, :, :mag_bins] = scales
        o_ref[0, :, mag_bins:] = scales

    _one(est_ref, est_out_ref)
    _one(clean_ref, clean_out_ref)


def _largest_divisor_tile(n, unit, cap):
    """Largest divisor of n that is a multiple of `unit` and <= cap (None if none)."""
    cap = max(unit, min(n, cap))
    best = None
    for cand in range(unit, cap + 1, unit):
        if n % cand == 0:
            best = cand
    return best


def acoustic_scaler(est, clean, zwicker_power, *, theta=0.01, eps=1.0):
    """est, clean: (B, 2F, T); zwicker_power: (F,). Returns two (B, 2F, T) f32 arrays."""
    assert eps > 0.0, "eps must be > 0 (log-based pow; module default is eps=1.0)"
    B, twoF, T = est.shape
    F = twoF // 2
    assert twoF == 2 * F
    assert zwicker_power.shape == (F,)
    # TODO(synk): the F != mag_bins crop/pad branch of the reference is not covered.

    # Hoist the per-frequency exponent out of the kernel (no per-step VPU work).
    exponent = (zwicker_power.astype(jnp.float32) - 1.0) * 0.5    # (F,)

    params = pltpu.CompilerParams(dimension_semantics=("parallel", "parallel"))
    elem_bytes = 4  # compute / stores are f32

    if T % _LANE == 0:
        # Native (B, 2F, T) layout: lane-dense T tiles, no wrapper transpose.
        tt = _largest_divisor_tile(
            T, _LANE, max(_LANE, _TARGET_BLOCK_BYTES // (twoF * elem_bytes)))
        kernel = functools.partial(_scaler_kernel_ft, mag_bins=F, theta=theta, eps=eps)
        data_spec = pl.BlockSpec((1, twoF, tt), lambda b, t: (b, 0, t))
        grid_spec = pltpu.PrefetchScalarGridSpec(
            num_scalar_prefetch=0,
            grid=(B, T // tt),
            in_specs=[pl.BlockSpec((1, F, 1), lambda b, t: (0, 0, 0)),
                      data_spec, data_spec],
            out_specs=[data_spec, data_spec],
        )
        return pl.pallas_call(
            kernel,
            out_shape=(jax.ShapeDtypeStruct((B, twoF, T), jnp.float32),
                       jax.ShapeDtypeStruct((B, twoF, T), jnp.float32)),
            grid_spec=grid_spec,
            compiler_params=params,
        )(exponent.reshape(1, F, 1), est, clean)

    # Small / ragged T: transpose so the 2F axis (multiple of 128 for typical
    # mag_bins) sits on lanes -> dense, unmasked vector stores.
    est_t = jnp.transpose(est, (0, 2, 1))          # (B, T, 2F)
    clean_t = jnp.transpose(clean, (0, 2, 1))
    tt = _largest_divisor_tile(
        T, _SUBLANE, max(_SUBLANE, _TARGET_BLOCK_BYTES // (twoF * elem_bytes)))
    if tt is None:
        tt = T                                     # full-dim block (always legal)
    kernel = functools.partial(_scaler_kernel_tf, mag_bins=F, theta=theta, eps=eps)
    data_spec = pl.BlockSpec((1, tt, twoF), lambda b, t: (b, t, 0))
    grid_spec = pltpu.PrefetchScalarGridSpec(
        num_scalar_prefetch=0,
        grid=(B, T // tt),
        in_specs=[pl.BlockSpec((1, 1, F), lambda b, t: (0, 0, 0)),
                  data_spec, data_spec],
        out_specs=[data_spec, data_spec],
    )
    est_s_t, clean_s_t = pl.pallas_call(
        kernel,
        out_shape=(jax.ShapeDtypeStruct((B, T, twoF), jnp.float32),
                   jax.ShapeDtypeStruct((B, T, twoF), jnp.float32)),
        grid_spec=grid_spec,
        compiler_params=params,
    )(exponent.reshape(1, 1, F), est_t, clean_t)
    return (jnp.transpose(est_s_t, (0, 2, 1)),
            jnp.transpose(clean_s_t, (0, 2, 1)))


def _reference(est, clean, zwicker_power, theta=0.01, eps=1.0):
    """Pure-JAX replica of the PyTorch forward (need_pad == 0 path)."""
    F = zwicker_power.shape[0]
    zw = zwicker_power.reshape(1, 1, F)

    def one(x):
        x = jnp.transpose(x, (0, 2, 1))               # (B, T, 2F)
        real, imag = x[..., :F], x[..., F:]
        power = real ** 2 + imag ** 2
        scales = (power + eps) ** ((zw - 1.0) * 0.5)  # (B, T, F)
        doubled = jnp.concatenate([scales, scales], axis=-1)   # repeat(1,1,2)
        doubled = jnp.transpose(doubled, (0, 2, 1))   # (B, 2F, T)
        return jnp.clip(doubled, theta, 1.0)

    return one(est), one(clean)


if __name__ == "__main__":
    B, MAG_BINS = 2, 128
    key = jax.random.PRNGKey(0)

    # Deterministic stand-in for constant.get_zwicker_power_to_nftt(mag_bins):
    # Zwicker-style loudness exponents, monotonically varying around ~0.23.
    zwicker_power = jnp.linspace(0.15, 0.35, MAG_BINS, dtype=jnp.float32)

    # T=16 exercises the transposed (lane-dense 2F) path;
    # T=256 exercises the native T-tiled path.
    for T in (16, 256):
        k_est, k_clean = jax.random.split(jax.random.fold_in(key, T))
        est = jax.random.normal(k_est, (B, 2 * MAG_BINS, T), dtype=jnp.float32)
        clean = jax.random.normal(k_clean, (B, 2 * MAG_BINS, T), dtype=jnp.float32)

        est_scales, clean_scales = acoustic_scaler(est, clean, zwicker_power)
        jax.block_until_ready((est_scales, clean_scales))

        ref_est, ref_clean = _reference(est, clean, zwicker_power)
        assert est_scales.shape == (B, 2 * MAG_BINS, T)
        assert clean_scales.shape == (B, 2 * MAG_BINS, T)
        assert jnp.allclose(est_scales, ref_est, atol=1e-5, rtol=1e-5)
        assert jnp.allclose(clean_scales, ref_clean, atol=1e-5, rtol=1e-5)

    print("KERNEL_OK")
</pallas_src>

<mosaic_0001>
module attributes {stable_mosaic.version = 11 : i64} {
  func.func @_scaler_kernel_tf(%arg0: i32, %arg1: i32, %arg2: memref<1x1x128xf32, #tpu.memory_space<vmem>>, %arg3: memref<1x16x256xf32, #tpu.memory_space<vmem>>, %arg4: memref<1x16x256xf32, #tpu.memory_space<vmem>>, %arg5: memref<1x16x256xf32, #tpu.memory_space<vmem>>, %arg6: memref<1x16x256xf32, #tpu.memory_space<vmem>>) attributes {dimension_semantics = [#tpu.dimension_semantics<parallel>, #tpu.dimension_semantics<parallel>], iteration_bounds = array<i64: 2, 1>, scalar_prefetch = 0 : i64, scratch_operands = 0 : i64, tpu.core_type = #tpu.core_type<tc>, window_params = [{pipeline_mode = #tpu.pipeline_mode<synchronous>, transform_indices = @transform_0, window_bounds = array<i64: 1, 1, 128>}, {transform_indices = @transform_1, window_bounds = array<i64: 1, 16, 256>}, {transform_indices = @transform_2, window_bounds = array<i64: 1, 16, 256>}, {transform_indices = @transform_3, window_bounds = array<i64: 1, 16, 256>}, {transform_indices = @transform_4, window_bounds = array<i64: 1, 16, 256>}]} {
    %c0 = arith.constant 0 : index
    %c0_0 = arith.constant 0 : index
    %c0_1 = arith.constant 0 : index
    %0 = vector.load %arg2[%c0, %c0_0, %c0_1] : memref<1x1x128xf32, #tpu.memory_space<vmem>>, vector<1x1x128xf32>
    %1 = vector.shape_cast %0 : vector<1x1x128xf32> to vector<1x128xf32>
    %c0_2 = arith.constant 0 : index
    %c0_3 = arith.constant 0 : index
    %c0_4 = arith.constant 0 : index
    %2 = vector.load %arg3[%c0_2, %c0_3, %c0_4] : memref<1x16x256xf32, #tpu.memory_space<vmem>>, vector<1x16x256xf32>
    %3 = vector.shape_cast %2 : vector<1x16x256xf32> to vector<16x256xf32>
    %4 = vector.extract_strided_slice %3 {offsets = [0, 0], sizes = [16, 128], strides = [1, 1]} : vector<16x256xf32> to vector<16x128xf32>
    %5 = vector.extract_strided_slice %3 {offsets = [0, 128], sizes = [16, 128], strides = [1, 1]} : vector<16x256xf32> to vector<16x128xf32>
    %6 = arith.mulf %4, %4 : vector<16x128xf32>
    %7 = arith.mulf %5, %5 : vector<16x128xf32>
    %8 = arith.addf %6, %7 : vector<16x128xf32>
    %cst = arith.constant 1.000000e+00 : f32
    %9 = vector.broadcast %cst : f32 to vector<16x128xf32>
    %10 = arith.addf %8, %9 : vector<16x128xf32>
    %11 = math.log %10 : vector<16x128xf32>
    %12 = vector.broadcast %1 : vector<1x128xf32> to vector<16x128xf32>
    %13 = arith.mulf %12, %11 : vector<16x128xf32>
    %14 = math.exp %13 : vector<16x128xf32>
    %cst_5 = arith.constant 0.00999999977 : f32
    %cst_6 = arith.constant 1.000000e+00 : f32
    %15 = vector.broadcast %cst_5 : f32 to vector<16x128xf32>
    %16 = arith.maximumf %15, %14 : vector<16x128xf32>
    %17 = vector.broadcast %cst_6 : f32 to vector<16x128xf32>
    %18 = arith.minimumf %17, %16 : vector<16x128xf32>
    %c0_7 = arith.constant 0 : index
    %c0_8 = arith.constant 0 : index
    %c0_9 = arith.constant 0 : index
    %19 = vector.load %arg5[%c0_7, %c0_8, %c0_9] : memref<1x16x256xf32, #tpu.memory_space<vmem>>, vector<1x16x128xf32>
    %20 = vector.shape_cast %19 : vector<1x16x128xf32> to vector<16x128xf32>
    %21 = vector.shape_cast %18 : vector<16x128xf32> to vector<1x16x128xf32>
    tpu.vector_store %arg5[%c0_7, %c0_8, %c0_9], %21 {strides = array<i32>} : memref<1x16x256xf32, #tpu.memory_space<vmem>>, vector<1x16x128xf32>,
    %c0_10 = arith.constant 0 : index
    %c0_11 = arith.constant 0 : index
    %c128 = arith.constant 128 : index
    %22 = vector.load %arg5[%c0_10, %c0_11, %c128] : memref<1x16x256xf32, #tpu.memory_space<vmem>>, vector<1x16x128xf32>
    %23 = vector.shape_cast %22 : vector<1x16x128xf32> to vector<16x128xf32>
    %24 = vector.shape_cast %18 : vector<16x128xf32> to vector<1x16x128xf32>
    tpu.vector_store %arg5[%c0_10, %c0_11, %c128], %24 {strides = array<i32>} : memref<1x16x256xf32, #tpu.memory_space<vmem>>, vector<1x16x128xf32>,
    %c0_12 = arith.constant 0 : index
    %c0_13 = arith.constant 0 : index
    %c0_14 = arith.constant 0 : index
    %25 = vector.load %arg4[%c0_12, %c0_13, %c0_14] : memref<1x16x256xf32, #tpu.memory_space<vmem>>, vector<1x16x256xf32>
    %26 = vector.shape_cast %25 : vector<1x16x256xf32> to vector<16x256xf32>
    %27 = vector.extract_strided_slice %26 {offsets = [0, 0], sizes = [16, 128], strides = [1, 1]} : vector<16x256xf32> to vector<16x128xf32>
    %28 = vector.extract_strided_slice %26 {offsets = [0, 128], sizes = [16, 128], strides = [1, 1]} : vector<16x256xf32> to vector<16x128xf32>
    %29 = arith.mulf %27, %27 : vector<16x128xf32>
    %30 = arith.mulf %28, %28 : vector<16x128xf32>
    %31 = arith.addf %29, %30 : vector<16x128xf32>
    %cst_15 = arith.constant 1.000000e+00 : f32
    %32 = vector.broadcast %cst_15 : f32 to vector<16x128xf32>
    %33 = arith.addf %31, %32 : vector<16x128xf32>
    %34 = math.log %33 : vector<16x128xf32>
    %35 = vector.broadcast %1 : vector<1x128xf32> to vector<16x128xf32>
    %36 = arith.mulf %35, %34 : vector<16x128xf32>
    %37 = math.exp %36 : vector<16x128xf32>
    %cst_16 = arith.constant 0.00999999977 : f32
    %cst_17 = arith.constant 1.000000e+00 : f32
    %38 = vector.broadcast %cst_16 : f32 to vector<16x128xf32>
    %39 = arith.maximumf %38, %37 : vector<16x128xf32>
    %40 = vector.broadcast %cst_17 : f32 to vector<16x128xf32>
    %41 = arith.minimumf %40, %39 : vector<16x128xf32>
    %c0_18 = arith.constant 0 : index
    %c0_19 = arith.constant 0 : index
    %c0_20 = arith.constant 0 : index
    %42 = vector.load %arg6[%c0_18, %c0_19, %c0_20] : memref<1x16x256xf32, #tpu.memory_space<vmem>>, vector<1x16x128xf32>
    %43 = vector.shape_cast %42 : vector<1x16x128xf32> to vector<16x128xf32>
    %44 = vector.shape_cast %41 : vector<16x128xf32> to vector<1x16x128xf32>
    tpu.vector_store %arg6[%c0_18, %c0_19, %c0_20], %44 {strides = array<i32>} : memref<1x16x256xf32, #tpu.memory_space<vmem>>, vector<1x16x128xf32>,
    %c0_21 = arith.constant 0 : index
    %c0_22 = arith.constant 0 : index
    %c128_23 = arith.constant 128 : index
    %45 = vector.load %arg6[%c0_21, %c0_22, %c128_23] : memref<1x16x256xf32, #tpu.memory_space<vmem>>, vector<1x16x128xf32>
    %46 = vector.shape_cast %45 : vector<1x16x128xf32> to vector<16x128xf32>
    %47 = vector.shape_cast %41 : vector<16x128xf32> to vector<1x16x128xf32>
    tpu.vector_store %arg6[%c0_21, %c0_22, %c128_23], %47 {strides = array<i32>} : memref<1x16x256xf32, #tpu.memory_space<vmem>>, vector<1x16x128xf32>,
    return
  }
  func.func @transform_0(%arg0: i32, %arg1: i32) -> (i32, i32, i32) {
    %c0_i32 = arith.constant 0 : i32
    %c0_i32_0 = arith.constant 0 : i32
    %c0_i32_1 = arith.constant 0 : i32
    %c0_i32_2 = arith.constant 0 : i32
    return %c0_i32, %c0_i32_0, %c0_i32_1 : i32, i32, i32
  }
  func.func @transform_1(%arg0: i32, %arg1: i32) -> (i32, i32, i32) {
    %c0_i32 = arith.constant 0 : i32
    %c0_i32_0 = arith.constant 0 : i32
    return %arg0, %arg1, %c0_i32 : i32, i32, i32
  }
  func.func @transform_2(%arg0: i32, %arg1: i32) -> (i32, i32, i32) {
    %c0_i32 = arith.constant 0 : i32
    %c0_i32_0 = arith.constant 0 : i32
    return %arg0, %arg1, %c0_i32 : i32, i32, i32
  }
  func.func @transform_3(%arg0: i32, %arg1: i32) -> (i32, i32, i32) {
    %c0_i32 = arith.constant 0 : i32
    %c0_i32_0 = arith.constant 0 : i32
    return %arg0, %arg1, %c0_i32 : i32, i32, i32
  }
  func.func @transform_4(%arg0: i32, %arg1: i32) -> (i32, i32, i32) {
    %c0_i32 = arith.constant 0 : i32
    %c0_i32_0 = arith.constant 0 : i32
    return %arg0, %arg1, %c0_i32 : i32, i32, i32
  }
}

</mosaic_0001>

<llo_original>
// kernel: tpu_custom_call.1
$region0: #{tpu_custom_call.1}
  #allocation0 [shape = 'u32[]', space=smem, size = 0x4, offset = 0x4, fixed_abs, tag = 'smem constant byte address 0x4 - core index']
  #allocation1 [shape = 'u32[72,128]{1,0:T(1,128)}', space=vmem, size = 0x9000, scoped, tag = 'internal scratch']
  %s0 = inlined_call_operand.hbm [shape: f32[1,1,128], index: 0, kind: input, shape index: {}]
  %s1 = inlined_call_operand.hbm [shape: f32[2,16,256], index: 1, kind: input, shape index: {}]
  %s2 = inlined_call_operand.hbm [shape: f32[2,16,256], index: 2, kind: input, shape index: {}]
  %s3 = inlined_call_operand.hbm [shape: f32[2,16,256], index: 3, kind: output, shape index: {0}]
  %s4 = inlined_call_operand.hbm [shape: f32[2,16,256], index: 4, kind: output, shape index: {1}]
  %5 = xla_tuple %s3, %s4
  %s6 = sld [smem:[#allocation0]]
  $region65: #{tpu_custom_call.1} parent=0
    _
  %s8 = ssub.s32 1, %s6
  %s9 = scalar_select 0, %s8, %s6
  $region1: #{tpu_custom_call.1} parent=0
    #allocation2 [shape = 'u8[512]{0}', space=vmem, size = 0x400, scoped, tag = 'input window, operand 0, single buffered']
    #allocation3 [shape = 's32[2]{0}', space=sflag, size = 0x8, scoped, tag = 'scoped memory for tpu_custom_call.1']
    #allocation4 [shape = 's32[2]{0}', space=sflag, size = 0x8, scoped, tag = 'scoped memory for tpu_custom_call.1']
    #allocation5 [shape = 'u8[32768]{0}', space=vmem, size = 0x8000, scoped, tag = 'input window, operand 1']
    #allocation6 [shape = 's32[2]{0}', space=sflag, size = 0x8, scoped, tag = 'scoped memory for tpu_custom_call.1']
    #allocation7 [shape = 'u8[32768]{0}', space=vmem, size = 0x8000, scoped, tag = 'input window, operand 2']
    #allocation8 [shape = 'u8[32768]{0}', space=vmem, size = 0x8000, scoped, tag = 'output window, operand 0']
    #allocation9 [shape = 'u8[32768]{0}', space=vmem, size = 0x8000, scoped, tag = 'output window, operand 1']
    #allocation10 [shape = 's32[2]{0}', space=sflag, size = 0x8, scoped, tag = 'scoped memory for tpu_custom_call.1']
    %10 = vsyncpa [#allocation3], 0
    %11 = vsyncpa [#allocation6], 0
    %s12 = scalar_lea.sflag [#allocation6], 1
    %13 = vsyncpa %s12, 0
    %14 = vsyncpa [#allocation4], 0
    %s15 = scalar_lea.sflag [#allocation4], 1
    %16 = vsyncpa %s15, 0
    %17 = vsyncpa [#allocation10], 0
    %s18 = scalar_lea.sflag [#allocation10], 1
    %19 = vsyncpa %s18, 0
    loop: start=0, step=1, limit=4
    $region2: #{tpu_custom_call.1} parent=1 // loop_pre_header
      _
    $region3: #{tpu_custom_call.1} parent=1 // loop_header
      %s21 = sphi 0, %s25
      %p22 = scmp.ge.s32.totalorder %s21, 4
      %s28 = sphi 0, %s40
      %s29 = sphi 0, %s36
      %s30 = sphi 0, %s28
      %s31 = sphi 0, %s29
      %s32 = sphi 0, %s30
      %s33 = sphi 0, %s31
      %s41 = sphi 0, %s41
      %s43 = sphi 0, %s41
      %s44 = sphi 0, %s43
      %s58 = sphi 0, %s44
      %s66 = sphi 0, %s68
      %s69 = sphi 0, %s66
      %s70 = sphi 0, %s69
      %s86 = sphi 0, %s70
      %s94 = sphi 0, %s96
      %s97 = sphi 0, %s94
      %s98 = sphi 0, %s97
      %s114 = sphi 0, %s98
      %s122 = sphi 0, %s124
      %s125 = sphi 0, %s122
      %s126 = sphi 0, %s125
      %s142 = sphi 0, %s126
      %s150 = sphi 0, %s152
      %s153 = sphi 0, %s150
      %s154 = sphi 0, %s153
      %s170 = sphi 0, %s154
    $region4: #{tpu_custom_call.1} parent=1 // loop_header_branch
      %24 = sbr.rel (%p22) target = $region8
    $region5: #{tpu_custom_call.1} parent=1 // loop_body
      %s26 = ssub.s32 %s21, 1
      %s27 = ssub.s32 %s21, 2
      %s34 = sadd.s32 1, %s29
      %p35 = scmp.ge.s32.totalorder %s34, 1
      %s36 = scalar_select %p35, 0, %s34
      %s37 = sadd.s32 1, %s28
      %s38 = scalar_select %p35, %s37, %s28
      %p39 = scmp.ge.s32.totalorder %s38, 2
      %s40 = scalar_select %p39, 0, %s38
      %s42 = sadd.s32 %s41, 1
      %p45 = scmp.eq.s32.totalorder %s21, 1
      %p46 = scmp.ne.s32.totalorder %s41, %s43
      %p47 = scmp.eq.s32.totalorder %s21, 0
      %p48 = por %p46, %p47
      %p49 = scmp.ne.s32.totalorder %s41, %s43
      %p50 = scmp.eq.s32.totalorder %s26, 1
      %p51 = por %p49, %p50
      %p52 = scmp.ne.s32.totalorder %s43, %s44
      %p53 = scmp.eq.s32.totalorder %s26, 0
      %p54 = por %p52, %p53
      %p55 = scmp.ne.s32.totalorder %s43, %s44
      %p56 = scmp.eq.s32.totalorder %s27, 1
      %p57 = por %p55, %p56
      %p59 = scmp.ne.s32.totalorder %s44, %s58
      %p60 = scmp.eq.s32.totalorder %s27, 0
      %p61 = por %p59, %p60
      %s62 = ssub.s32 %s28, %s40
      %s63 = ssub.s32 %s29, %s36
      %s64 = sor.u32 %s62, %s63
      %p65 = scmp.eq.s32.totalorder %s64, 0
      %s67 = sadd.s32 %s66, 1
      %s68 = scalar_select %p65, %s66, %s67
      %p71 = pneg %p65
      %p72 = scmp.eq.s32.totalorder %s21, 1
      %p73 = por %p71, %p72
      %p74 = scmp.ne.s32.totalorder %s66, %s69
      %p75 = scmp.eq.s32.totalorder %s21, 0
      %p76 = por %p74, %p75
      %p77 = scmp.ne.s32.totalorder %s66, %s69
      %p78 = scmp.eq.s32.totalorder %s26, 1
      %p79 = por %p77, %p78
      %p80 = scmp.ne.s32.totalorder %s69, %s70
      %p81 = scmp.eq.s32.totalorder %s26, 0
      %p82 = por %p80, %p81
      %p83 = scmp.ne.s32.totalorder %s69, %s70
      %p84 = scmp.eq.s32.totalorder %s27, 1
      %p85 = por %p83, %p84
      %p87 = scmp.ne.s32.totalorder %s70, %s86
      %p88 = scmp.eq.s32.totalorder %s27, 0
      %p89 = por %p87, %p88
      %s90 = ssub.s32 %s28, %s40
      %s91 = ssub.s32 %s29, %s36
      %s92 = sor.u32 %s90, %s91
      %p93 = scmp.eq.s32.totalorder %s92, 0
      %s95 = sadd.s32 %s94, 1
      %s96 = scalar_select %p93, %s94, %s95
      %p99 = pneg %p93
      %p100 = scmp.eq.s32.totalorder %s21, 1
      %p101 = por %p99, %p100
      %p102 = scmp.ne.s32.totalorder %s94, %s97
      %p103 = scmp.eq.s32.totalorder %s21, 0
      %p104 = por %p102, %p103
      %p105 = scmp.ne.s32.totalorder %s94, %s97
      %p106 = scmp.eq.s32.totalorder %s26, 1
      %p107 = por %p105, %p106
      %p108 = scmp.ne.s32.totalorder %s97, %s98
      %p109 = scmp.eq.s32.totalorder %s26, 0
      %p110 = por %p108, %p109
      %p111 = scmp.ne.s32.totalorder %s97, %s98
      %p112 = scmp.eq.s32.totalorder %s27, 1
      %p113 = por %p111, %p112
      %p115 = scmp.ne.s32.totalorder %s98, %s114
      %p116 = scmp.eq.s32.totalorder %s27, 0
      %p117 = por %p115, %p116
      %s118 = ssub.s32 %s28, %s40
      %s119 = ssub.s32 %s29, %s36
      %s120 = sor.u32 %s118, %s119
      %p121 = scmp.eq.s32.totalorder %s120, 0
      %s123 = sadd.s32 %s122, 1
      %s124 = scalar_select %p121, %s122, %s123
      %p127 = pneg %p121
      %p128 = scmp.eq.s32.totalorder %s21, 1
      %p129 = por %p127, %p128
      %p130 = scmp.ne.s32.totalorder %s122, %s125
      %p131 = scmp.eq.s32.totalorder %s21, 0
      %p132 = por %p130, %p131
      %p133 = scmp.ne.s32.totalorder %s122, %s125
      %p134 = scmp.eq.s32.totalorder %s26, 1
      %p135 = por %p133, %p134
      %p136 = scmp.ne.s32.totalorder %s125, %s126
      %p137 = scmp.eq.s32.totalorder %s26, 0
      %p138 = por %p136, %p137
      %p139 = scmp.ne.s32.totalorder %s125, %s126
      %p140 = scmp.eq.s32.totalorder %s27, 1
      %p141 = por %p139, %p140
      %p143 = scmp.ne.s32.totalorder %s126, %s142
      %p144 = scmp.eq.s32.totalorder %s27, 0
      %p145 = por %p143, %p144
      %s146 = ssub.s32 %s28, %s40
      %s147 = ssub.s32 %s29, %s36
      %s148 = sor.u32 %s146, %s147
      %p149 = scmp.eq.s32.totalorder %s148, 0
      %s151 = sadd.s32 %s150, 1
      %s152 = scalar_select %p149, %s150, %s151
      %p155 = pneg %p149
      %p156 = scmp.eq.s32.totalorder %s21, 1
      %p157 = por %p155, %p156
      %p158 = scmp.ne.s32.totalorder %s150, %s153
      %p159 = scmp.eq.s32.totalorder %s21, 0
      %p160 = por %p158, %p159
      %p161 = scmp.ne.s32.totalorder %s150, %s153
      %p162 = scmp.eq.s32.totalorder %s26, 1
      %p163 = por %p161, %p162
      %p164 = scmp.ne.s32.totalorder %s153, %s154
      %p165 = scmp.eq.s32.totalorder %s26, 0
      %p166 = por %p164, %p165
      %p167 = scmp.ne.s32.totalorder %s153, %s154
      %p168 = scmp.eq.s32.totalorder %s27, 1
      %p169 = por %p167, %p168
      %p171 = scmp.ne.s32.totalorder %s154, %s170
      %p172 = scmp.eq.s32.totalorder %s27, 0
      %p173 = por %p171, %p172
      %p174 = scmp.le.s32.totalorder 1, %s21
      %p175 = scmp.lt.s32.totalorder %s21, 3
      %p176 = pnand %p174, %p175
      %p177 = pneg %p176
      // Predicated region
      $region9: #{tpu_custom_call.1} parent=5 // pred_check
        _
      $region10: #{tpu_custom_call.1} parent=5 // pred_check_branch
        %179 = sbr.rel (%p176) target = $region12
      $region11: #{tpu_custom_call.1} parent=5 // pred_region
        %s180 = ssub.s32 %s21, 1
        // Predicated region
        $region13: #{tpu_custom_call.1} parent=11 // pred_check
          %p181 = pneg %p54
        $region14: #{tpu_custom_call.1} parent=11 // pred_check_branch
          %183 = sbr.rel (%p181) target = $region16
        $region15: #{tpu_custom_call.1} parent=11 // pred_region
          %185 = vsyncadd [#allocation3], 0
          %s187 = sshll.u32 %s0, 4
          %s188 = int_to_ptr.hbm [resolvable:$true] %s187
          %s189 = sshll.u32 [#allocation2], 4
          %s190 = int_to_ptr.vmem [resolvable:$true] %s189
          %192 = dma.hbm_to_vmem [thread:$0]  %s188, 16, %s190, [#allocation3]
        $region16: #{tpu_custom_call.1} parent=11 // pred_fallthru
          _
      $region12: #{tpu_custom_call.1} parent=5 // pred_fallthru
        _
      %p193 = scmp.lt.s32.totalorder %s21, 2
      // Predicated region
      $region17: #{tpu_custom_call.1} parent=5 // pred_check
        %p194 = pneg %p193
      $region18: #{tpu_custom_call.1} parent=5 // pred_check_branch
        %196 = sbr.rel (%p194) target = $region20
      $region19: #{tpu_custom_call.1} parent=5 // pred_region
        // Predicated region
        $region21: #{tpu_custom_call.1} parent=19 // pred_check
          %p197 = pneg %p76
        $region22: #{tpu_custom_call.1} parent=19 // pred_check_branch
          %199 = sbr.rel (%p197) target = $region24
        $region23: #{tpu_custom_call.1} parent=19 // pred_region
          %s200 = sand.u32 %s21, 1
          %s201 = scalar_lea.sflag [#allocation6], %s200
          %s202 = sand.u32 %s66, 1
          %s203 = smul.addr %s202, 32
          %s204 = scalar_lea.vmem [#allocation5], %s203
          %s205 = smul.u32 2, %s29
          %207 = vsyncadd %s201, 0
          %s208 = smul.addr %s205, 2
          %s209 = smul.addr %s28, 4
          %s210 = sadd.s32 %s208, %s209
          %s211 = smul.addr %s210, 8
          %s212 = scalar_lea.hbm %s1, %s211
          %s213 = sshll.u32 %s212, 4
          %s214 = int_to_ptr.hbm [resolvable:$true] %s213
          %s215 = sshll.u32 %s204, 4
          %s216 = int_to_ptr.vmem [resolvable:$true] %s215
          %221 = dma.hbm_to_vmem [thread:$0]  %s214, 512, %s216, %s201, 256, 256, 16
        $region24: #{tpu_custom_call.1} parent=19 // pred_fallthru
          _
        // Predicated region
        $region25: #{tpu_custom_call.1} parent=19 // pred_check
          %p222 = pneg %p104
        $region26: #{tpu_custom_call.1} parent=19 // pred_check_branch
          %224 = sbr.rel (%p222) target = $region28
        $region27: #{tpu_custom_call.1} parent=19 // pred_region
          %s225 = sand.u32 %s21, 1
          %s226 = scalar_lea.sflag [#allocation6], %s225
          %s227 = sand.u32 %s94, 1
          %s228 = smul.addr %s227, 32
          %s229 = scalar_lea.vmem [#allocation7], %s228
          %s230 = smul.u32 2, %s29
          %232 = vsyncadd %s226, 0
          %s233 = smul.addr %s230, 2
          %s234 = smul.addr %s28, 4
          %s235 = sadd.s32 %s233, %s234
          %s236 = smul.addr %s235, 8
          %s237 = scalar_lea.hbm %s2, %s236
          %s238 = sshll.u32 %s237, 4
          %s239 = int_to_ptr.hbm [resolvable:$true] %s238
          %s240 = sshll.u32 %s229, 4
          %s241 = int_to_ptr.vmem [resolvable:$true] %s240
          %246 = dma.hbm_to_vmem [thread:$0]  %s239, 512, %s241, %s226, 256, 256, 16
        $region28: #{tpu_custom_call.1} parent=19 // pred_fallthru
          _
      $region20: #{tpu_custom_call.1} parent=5 // pred_fallthru
        _
      %p247 = scmp.le.s32.totalorder 1, %s21
      %p248 = scmp.lt.s32.totalorder %s21, 3
      %p249 = pnand %p247, %p248
      %p250 = pneg %p249
      // Predicated region
      $region29: #{tpu_custom_call.1} parent=5 // pred_check
        _
      $region30: #{tpu_custom_call.1} parent=5 // pred_check_branch
        %252 = sbr.rel (%p249) target = $region32
      $region31: #{tpu_custom_call.1} parent=5 // pred_region
        %s253 = ssub.s32 %s21, 1
        // Predicated region
        $region33: #{tpu_custom_call.1} parent=31 // pred_check
          %p254 = pneg %p54
        $region34: #{tpu_custom_call.1} parent=31 // pred_check_branch
          %256 = sbr.rel (%p254) target = $region36
        $region35: #{tpu_custom_call.1} parent=31 // pred_region
          %258 = dma.done [#allocation3], 16
        $region36: #{tpu_custom_call.1} parent=31 // pred_fallthru
          _
        %s259 = sand.u32 %s26, 1
        %s260 = scalar_lea.sflag [#allocation6], %s259
        %s261 = sand.u32 %s69, 1
        %s262 = smul.addr %s261, 32
        %s263 = scalar_lea.vmem [#allocation5], %s262
        // Predicated region
        $region37: #{tpu_custom_call.1} parent=31 // pred_check
          %p264 = pneg %p82
        $region38: #{tpu_custom_call.1} parent=31 // pred_check_branch
          %266 = sbr.rel (%p264) target = $region40
        $region39: #{tpu_custom_call.1} parent=31 // pred_region
          %268 = dma.done %s260, 512
        $region40: #{tpu_custom_call.1} parent=31 // pred_fallthru
          _
        %s269 = sand.u32 %s26, 1
        %s270 = scalar_lea.sflag [#allocation6], %s269
        %s271 = sand.u32 %s97, 1
        %s272 = smul.addr %s271, 32
        %s273 = scalar_lea.vmem [#allocation7], %s272
        // Predicated region
        $region41: #{tpu_custom_call.1} parent=31 // pred_check
          %p274 = pneg %p110
        $region42: #{tpu_custom_call.1} parent=31 // pred_check_branch
          %276 = sbr.rel (%p274) target = $region44
        $region43: #{tpu_custom_call.1} parent=31 // pred_region
          %278 = dma.done %s270, 512
        $region44: #{tpu_custom_call.1} parent=31 // pred_fallthru
          _
        %p279 = pneg %p54
        %p280 = pneg %p51
        %s281 = sand.u32 %s26, 1
        %s282 = scalar_lea.sflag [#allocation6], %s281
        %s283 = sand.u32 %s69, 1
        %s284 = smul.addr %s283, 32
        %s285 = scalar_lea.vmem [#allocation5], %s284
        %p286 = pneg %p82
        %p287 = pneg %p79
        %s288 = sand.u32 %s26, 1
        %s289 = scalar_lea.sflag [#allocation6], %s288
        %s290 = sand.u32 %s97, 1
        %s291 = smul.addr %s290, 32
        %s292 = scalar_lea.vmem [#allocation7], %s291
        %p293 = pneg %p110
        %p294 = pneg %p107
        %p295 = pneg %p138
        %p296 = pneg %p135
        %s297 = sand.u32 %s125, 1
        %s298 = scalar_lea.sflag [#allocation4], %s297
        %s299 = sand.u32 %s125, 1
        %s300 = smul.addr %s299, 32
        %s301 = scalar_lea.vmem [#allocation8], %s300
        %p302 = pneg %p166
        %p303 = pneg %p163
        %s304 = sand.u32 %s153, 1
        %s305 = scalar_lea.sflag [#allocation10], %s304
        %s306 = sand.u32 %s153, 1
        %s307 = smul.addr %s306, 32
        %s308 = scalar_lea.vmem [#allocation9], %s307
        %s309 = smul.u32 2, %s31
        %s310 = smul.u32 2, %s31
        %s311 = smul.u32 2, %s31
        %s312 = smul.u32 2, %s31
        %v313 = vld [vmem:[#allocation2] sm:$0x1]
        %v314 = vld [vmem:[%s263] sm:$0xff]
        %v315 = vld [vmem:[%s263 + $0x8] sm:$0xff]
        %v316 = vld [vmem:[%s263 + $0x10] sm:$0xff]
        %v317 = vld [vmem:[%s263 + $0x18] sm:$0xff]
        %v318 = vmul.f32 %v314, %v314
        %v319 = vmul.f32 %v316, %v316
        %v320 = vmul.f32 %v315, %v315
        %v321 = vmul.f32 %v317, %v317
        %v322 = vadd.f32 %v318, %v320
        %v323 = vadd.f32 %v319, %v321
        %v324 = vadd.f32 %v322, 1.0
        %v325 = vadd.f32 %v323, 1.0
        %v326 = vlog2.pop %v324
        %v327 = vmul.f32 %v326, 0.6931472
        %v328 = vlog2.pop %v325
        %v329 = vmul.f32 %v328, 0.6931472
        %v331 = vperm.slane %v313, 0
        %v333 = vmul.f32 %v331, %v327
        %v334 = vmul.f32 %v331, %v329
        %v335 = vmul.f32 %v333, 1.442695
        %v336 = vpow.pop %v335
        %v337 = vmul.f32 %v334, 1.442695
        %v338 = vpow.pop %v337
        %v339 = vmax.f32 %v336, 0.01
        %v340 = vmax.f32 %v338, 0.01
        %v341 = vmin.f32 %v339, 1.0
        %v342 = vmin.f32 %v340, 1.0
        %343 = vst [vmem:[%s301] sm:$0xff] %v341
        %344 = vst [vmem:[%s301 + $0x10] sm:$0xff] %v342
        %345 = vst [vmem:[%s301 + $0x8] sm:$0xff] %v341
        %346 = vst [vmem:[%s301 + $0x18] sm:$0xff] %v342
        %v347 = vld [vmem:[%s273] sm:$0xff]
        %v348 = vld [vmem:[%s273 + $0x8] sm:$0xff]
        %v349 = vld [vmem:[%s273 + $0x10] sm:$0xff]
        %v350 = vld [vmem:[%s273 + $0x18] sm:$0xff]
        %v351 = vmul.f32 %v347, %v347
        %v352 = vmul.f32 %v349, %v349
        %v353 = vmul.f32 %v348, %v348
        %v354 = vmul.f32 %v350, %v350
        %v355 = vadd.f32 %v351, %v353
        %v356 = vadd.f32 %v352, %v354
        %v357 = vadd.f32 %v355, 1.0
        %v358 = vadd.f32 %v356, 1.0
        %v359 = vlog2.pop %v357
        %v360 = vmul.f32 %v359, 0.6931472
        %v361 = vlog2.pop %v358
        %v362 = vmul.f32 %v361, 0.6931472
        %v363 = vmul.f32 %v331, %v360
        %v364 = vmul.f32 %v331, %v362
        %v365 = vmul.f32 %v363, 1.442695
        %v366 = vpow.pop %v365
        %v367 = vmul.f32 %v364, 1.442695
        %v368 = vpow.pop %v367
        %v369 = vmax.f32 %v366, 0.01
        %v370 = vmax.f32 %v368, 0.01
        %v371 = vmin.f32 %v369, 1.0
        %v372 = vmin.f32 %v370, 1.0
        %373 = vst [vmem:[%s308] sm:$0xff] %v371
        %374 = vst [vmem:[%s308 + $0x10] sm:$0xff] %v372
        %375 = vst [vmem:[%s308 + $0x8] sm:$0xff] %v371
        %376 = vst [vmem:[%s308 + $0x18] sm:$0xff] %v372
        %s377 = sand.u32 %s125, 1
        %s378 = scalar_lea.sflag [#allocation4], %s377
        %s379 = sand.u32 %s125, 1
        %s380 = smul.addr %s379, 32
        %s381 = scalar_lea.vmem [#allocation8], %s380
        %s382 = sand.u32 %s153, 1
        %s383 = scalar_lea.sflag [#allocation10], %s382
        %s384 = sand.u32 %s153, 1
        %s385 = smul.addr %s384, 32
        %s386 = scalar_lea.vmem [#allocation9], %s385
        // Predicated region
        $region45: #{tpu_custom_call.1} parent=31 // pred_check
          %p387 = pneg %p135
        $region46: #{tpu_custom_call.1} parent=31 // pred_check_branch
          %389 = sbr.rel (%p387) target = $region48
        $region47: #{tpu_custom_call.1} parent=31 // pred_region
          %s390 = smul.u32 2, %s31
          %392 = vsyncadd %s378, 0
          %s393 = smul.addr %s390, 2
          %s394 = smul.addr %s30, 4
          %s395 = sadd.s32 %s393, %s394
          %s396 = smul.addr %s395, 8
          %s397 = scalar_lea.hbm %s3, %s396
          %s398 = sshll.u32 %s381, 4
          %s399 = int_to_ptr.vmem [resolvable:$true] %s398
          %s400 = sshll.u32 %s397, 4
          %s401 = int_to_ptr.hbm [resolvable:$true] %s400
          %406 = dma.vmem_to_hbm [thread:$0]  %s399, 512, %s401, %s378, 256, 256, 16
        $region48: #{tpu_custom_call.1} parent=31 // pred_fallthru
          _
        // Predicated region
        $region49: #{tpu_custom_call.1} parent=31 // pred_check
          %p407 = pneg %p163
        $region50: #{tpu_custom_call.1} parent=31 // pred_check_branch
          %409 = sbr.rel (%p407) target = $region52
        $region51: #{tpu_custom_call.1} parent=31 // pred_region
          %s410 = smul.u32 2, %s31
          %412 = vsyncadd %s383, 0
          %s413 = smul.addr %s410, 2
          %s414 = smul.addr %s30, 4
          %s415 = sadd.s32 %s413, %s414
          %s416 = smul.addr %s415, 8
          %s417 = scalar_lea.hbm %s4, %s416
          %s418 = sshll.u32 %s386, 4
          %s419 = int_to_ptr.vmem [resolvable:$true] %s418
          %s420 = sshll.u32 %s417, 4
          %s421 = int_to_ptr.hbm [resolvable:$true] %s420
          %426 = dma.vmem_to_hbm [thread:$0]  %s419, 512, %s421, %s383, 256, 256, 16
        $region52: #{tpu_custom_call.1} parent=31 // pred_fallthru
          _
      $region32: #{tpu_custom_call.1} parent=5 // pred_fallthru
        _
      %p427 = scmp.le.s32.totalorder 2, %s21
      // Predicated region
      $region53: #{tpu_custom_call.1} parent=5 // pred_check
        %p428 = pneg %p427
      $region54: #{tpu_custom_call.1} parent=5 // pred_check_branch
        %430 = sbr.rel (%p428) target = $region56
      $region55: #{tpu_custom_call.1} parent=5 // pred_region
        %s431 = ssub.s32 %s21, 2
        // Predicated region
        $region57: #{tpu_custom_call.1} parent=55 // pred_check
          %p432 = pneg %p141
        $region58: #{tpu_custom_call.1} parent=55 // pred_check_branch
          %434 = sbr.rel (%p432) target = $region60
        $region59: #{tpu_custom_call.1} parent=55 // pred_region
          %s435 = sand.u32 %s126, 1
          %s436 = scalar_lea.sflag [#allocation4], %s435
          %s437 = sand.u32 %s126, 1
          %s438 = smul.addr %s437, 32
          %s439 = scalar_lea.vmem [#allocation8], %s438
          %441 = dma.done %s436, 512
        $region60: #{tpu_custom_call.1} parent=55 // pred_fallthru
          _
        // Predicated region
        $region61: #{tpu_custom_call.1} parent=55 // pred_check
          %p442 = pneg %p169
        $region62: #{tpu_custom_call.1} parent=55 // pred_check_branch
          %444 = sbr.rel (%p442) target = $region64
        $region63: #{tpu_custom_call.1} parent=55 // pred_region
          %s445 = sand.u32 %s154, 1
          %s446 = scalar_lea.sflag [#allocation10], %s445
          %s447 = sand.u32 %s154, 1
          %s448 = smul.addr %s447, 32
          %s449 = scalar_lea.vmem [#allocation9], %s448
          %451 = dma.done %s446, 512
        $region64: #{tpu_custom_call.1} parent=55 // pred_fallthru
          _
      $region56: #{tpu_custom_call.1} parent=5 // pred_fallthru
        _
    $region6: #{tpu_custom_call.1} parent=1 // loop_footer
      %s25 = sadd.s32 1, %s21
    $region7: #{tpu_custom_call.1} parent=1 // loop_footer_branch
      %20 = sbr.rel target = $region3
    $region8: #{tpu_custom_call.1} parent=1 // loop_exit
      _
    %452 = vsyncpa [#allocation3], 1
    %s453 = scalar_lea.sflag [#allocation3], 1
    %454 = vsyncpa %s453, 1
    %455 = vsyncpa [#allocation6], 1
    %s456 = scalar_lea.sflag [#allocation6], 1
    %457 = vsyncpa %s456, 1
    %458 = vsyncpa [#allocation4], 1
    %s459 = scalar_lea.sflag [#allocation4], 1
    %460 = vsyncpa %s459, 1
    %461 = vsyncpa [#allocation10], 1
    %s462 = scalar_lea.sflag [#allocation10], 1
    %463 = vsyncpa %s462, 1

</llo_original>
